<compile_context>
chip_gen: v6e
topology: v6e:2x2x1
jax: 0.10.0
libtpu: 0.0.40
codegen_flags: <defaults>
</compile_context>

<pallas_src>
import jax
import jax.numpy as jnp
import numpy as np
from jax.experimental import pallas as pl
from jax.experimental.pallas import tpu as pltpu


def _round8(n):
    return ((n + 7) // 8) * 8


def _lstm_garch_kernel(x_ref, slab_ref, out_ref):
    f32 = jnp.float32
    B = out_ref.shape[0]
    TB, D = x_ref.shape
    T = TB // B
    eightH = slab_ref.shape[1]
    H = eightH // 8
    d_pad = _round8(D)
    wcomb_off = _round8(d_pad + 1)
    misc_off = wcomb_off + 2 * H

    # ---- hoisted weight loads (each read once) ----
    w_ih0e = slab_ref[0:D, :]                              # (D, 8H)  layer-0 input proj (extended)
    bias_row = slab_ref[d_pad:d_pad + 1, :]                # (1, 8H)  b0 | b1, pre-scaled
    w_comb = slab_ref[wcomb_off:wcomb_off + 2 * H, :]      # (2H, 8H) [[w_hh0, w_ih1],[0, w_hh1]]
    misc = slab_ref[misc_off:misc_off + B, :]              # (B, 8H)  gmat | gvec | fc

    bias_b = jnp.broadcast_to(bias_row, (B, eightH))       # hoisted broadcast

    # ---- layer-0 input projection for ALL timesteps in one matmul (off the
    #      serial chain); both layers' biases are folded into bias_row. ----
    addend = (jnp.dot(x_ref[...], w_ih0e, preferred_element_type=f32)
              + jnp.broadcast_to(bias_row, (TB, eightH)))  # (T*B, 8H)

    # Gate column blocks: [i0 i1 f0 f1 o0 o1 | g0 g1].  Sigmoid is computed as
    # 0.5*tanh(0.5*x)+0.5 with the 0.5 pre-folded into the weights, so ONE tanh
    # over the full 8H width evaluates every gate of both layers.
    def gates(z):
        tz = jnp.tanh(z)
        sg = 0.5 * tz[:, :6 * H] + 0.5
        return sg[:, 0:2 * H], sg[:, 2 * H:4 * H], sg[:, 4 * H:6 * H], tz[:, 6 * H:]

    # ---- wavefront step 0 (peeled: h = c = 0, the matmul contributes nothing) ----
    mask0 = jnp.concatenate([jnp.ones((1, H), f32), jnp.zeros((1, H), f32)], axis=1)
    i_p, f_p, o_p, g_p = gates(addend[0:B, :])
    c_pair = (i_p * g_p) * mask0                           # layer-1 half stays exactly 0
    h_pair = o_p * jnp.tanh(c_pair)                        # tanh(0)=0 -> layer-1 half stays 0

    # ---- wavefront steps 1..T: layer-0 @ time s and layer-1 @ time s-1 in ONE
    #      matmul.  Step T only produces the final layer-1 state (layer-0 half
    #      is computed but unused). ----
    # TODO(synk): switch to lax.fori_loop(..., unroll=k) + pl.ds if T grows past ~32.
    for s in range(1, T + 1):
        add_s = addend[s * B:(s + 1) * B, :] if s < T else bias_b
        z = add_s + jnp.dot(h_pair, w_comb, preferred_element_type=f32)
        i_p, f_p, o_p, g_p = gates(z)
        c_pair = f_p * c_pair + i_p * g_p                  # [c0[s] | c1[s-1]]
        h_pair = o_p * jnp.tanh(c_pair)                    # [h0[s] | h1[s-1]]

    h1 = h_pair[:, H:2 * H]                                # layer-1 hidden state at t = T-1

    # ---- fc on the last hidden state (dropout = identity): VPU mul + lane reduce ----
    wfc = misc[0:1, 4 * H:5 * H]                           # (1, H)
    bfc = misc[0:1, 5 * H:5 * H + 1]                       # (1, 1)
    pred = jnp.sum(h1 * wfc, axis=-1, keepdims=True) + bfc  # (B, 1)

    # ---- GARCH closed form: cv = Gmat @ r2 + gvec ----
    x_last0 = x_ref[(T - 1) * B:TB, 0:1]                   # x[:, -1, 0] as (B, 1)
    res = x_last0 - pred
    r2 = res * res
    cv = jnp.dot(misc[:, 0:B], r2, preferred_element_type=f32) + misc[:, B:B + 1]

    out_ref[...] = jnp.concatenate([pred, cv], axis=1)     # (B, 2): [pred | cv]


def prepare_params(params, input_dim, batch):
    """One-time (host-side, non-jitted) packing of all weights into one slab.

    Row layout (8-row aligned sub-blocks, 8H lanes wide):
      [0 : D)                     W_ih0 extended into the 8H gate layout
      [d_pad]                     bias row (b0 in layer-0 cols, b1 in layer-1 cols)
      [wcomb_off : wcomb_off+2H)  W_comb = [[w_hh0, w_ih1], [0, w_hh1]]
      [misc_off : misc_off+B)     GARCH Gmat (cols 0:B), gvec (col B),
                                  fc weight (row 0, cols 4H:5H), fc bias (row 0, col 5H)
    Gate column blocks are [i0 i1 f0 f1 o0 o1 g0 g1]; sigmoid-gate columns are
    pre-scaled by 0.5 so a single tanh in the kernel evaluates every gate.
    """
    H = params['w_hh0'].shape[1]
    D = input_dim
    B = batch
    eightH = 8 * H
    d_pad = _round8(D)
    wcomb_off = _round8(d_pad + 1)
    misc_off = wcomb_off + 2 * H
    rows = misc_off + max(8, _round8(B))
    slab = np.zeros((rows, eightH), np.float32)

    def split(w):   # PyTorch (4H, K), row gate order (i, f, g, o) -> (K, H) per gate
        w = np.asarray(w, np.float32)
        return {'i': w[0:H].T, 'f': w[H:2 * H].T, 'g': w[2 * H:3 * H].T, 'o': w[3 * H:].T}

    def splitb(bi, bh):
        b = np.asarray(bi, np.float32) + np.asarray(bh, np.float32)
        return {'i': b[0:H], 'f': b[H:2 * H], 'g': b[2 * H:3 * H], 'o': b[3 * H:]}

    col = lambda k: slice(k * H, (k + 1) * H)
    blk = {0: {'i': 0, 'f': 2, 'o': 4, 'g': 6},      # column block per (layer, gate)
           1: {'i': 1, 'f': 3, 'o': 5, 'g': 7}}
    scl = {'i': 0.5, 'f': 0.5, 'o': 0.5, 'g': 1.0}   # sigmoid 0.5-scale folded into weights

    def place(rows_slc, gdict, layer):
        for gname, gval in gdict.items():
            slab[rows_slc, col(blk[layer][gname])] = scl[gname] * gval

    place(slice(0, D), split(params['w_ih0']), 0)                          # W_ih0_ext
    place(d_pad, splitb(params['b_ih0'], params['b_hh0']), 0)              # bias row: b0
    place(d_pad, splitb(params['b_ih1'], params['b_hh1']), 1)              #           b1
    place(slice(wcomb_off, wcomb_off + H), split(params['w_hh0']), 0)      # W_comb rows 0..H
    place(slice(wcomb_off, wcomb_off + H), split(params['w_ih1']), 1)
    place(slice(wcomb_off + H, wcomb_off + 2 * H), split(params['w_hh1']), 1)

    # GARCH closed form:  cv = Gmat @ r2 + gvec, with
    # cv[t] = sum_{j<=t} beta^(t-j) * (omega + alpha * r2_shift[j]),
    # r2_shift[0] = r2[0], r2_shift[j] = r2[j-1] for j >= 1.
    alpha = float(params['alpha']); beta = float(params['beta']); omega = float(params['omega'])
    idx = np.arange(B)
    d = idx[:, None] - idx[None, :]
    P = np.where(d >= 0, beta ** np.clip(d, 0, None), 0.0)                 # P[t,j] = beta^(t-j)
    PS = np.concatenate([P[:, 1:], np.zeros((B, 1))], axis=1)              # fold the r2 shift
    PS[:, 0] += P[:, 0]
    slab[misc_off:misc_off + B, 0:B] = (alpha * PS).astype(np.float32)
    slab[misc_off:misc_off + B, B] = (omega * P.sum(axis=1)).astype(np.float32)
    slab[misc_off, 4 * H:5 * H] = np.asarray(params['w_fc'], np.float32)[0]
    slab[misc_off, 5 * H] = float(np.asarray(params['b_fc']).reshape(-1)[0])
    return jnp.asarray(slab)


def init_params(key, input_dim, hidden):
    H = hidden
    s = 1.0 / np.sqrt(H)
    keys = jax.random.split(key, 10)

    def u(k, shape):
        return jax.random.uniform(k, shape, jnp.float32, -s, s)

    return dict(
        w_ih0=u(keys[0], (4 * H, input_dim)),
        w_hh0=u(keys[1], (4 * H, H)),
        b_ih0=u(keys[2], (4 * H,)),
        b_hh0=u(keys[3], (4 * H,)),
        w_ih1=u(keys[4], (4 * H, H)),
        w_hh1=u(keys[5], (4 * H, H)),
        b_ih1=u(keys[6], (4 * H,)),
        b_hh1=u(keys[7], (4 * H,)),
        w_fc=u(keys[8], (1, H)),
        b_fc=u(keys[9], (1,)),
        alpha=jnp.float32(0.05),
        beta=jnp.float32(0.9),
        omega=jnp.float32(0.1),
    )


@jax.jit
def lstm_garch_forward(x, slab):
    """x: (B, T, D) f32 (batch_first, like PyTorch).  slab: from prepare_params().
    Returns (prediction (B,1), conditional_variance (B,))."""
    B, T, D = x.shape
    x_flat = jnp.transpose(x, (1, 0, 2)).reshape(T * B, D)   # time-major rows
    out = pl.pallas_call(
        _lstm_garch_kernel,
        out_shape=jax.ShapeDtypeStruct((B, 2), jnp.float32),
        in_specs=[pl.BlockSpec(memory_space=pltpu.MemorySpace.VMEM)] * 2,
        out_specs=pl.BlockSpec(memory_space=pltpu.MemorySpace.VMEM),
    )(x_flat, slab)
    return out[:, 0:1], out[:, 1]


def reference_forward(x, params):
    """Pure-JAX eval-mode reference matching the PyTorch module."""
    B, T, D = x.shape
    H = params['w_hh0'].shape[1]
    hp = jax.lax.Precision.HIGHEST

    def lstm_layer(inp, w_ih, w_hh, b_ih, b_hh):
        h = jnp.zeros((B, H), jnp.float32)
        c = jnp.zeros((B, H), jnp.float32)
        outs = []
        for t in range(T):
            g = (jnp.dot(inp[:, t, :], w_ih.T, precision=hp) + b_ih
                 + jnp.dot(h, w_hh.T, precision=hp) + b_hh)
            i = jax.nn.sigmoid(g[:, :H])
            f = jax.nn.sigmoid(g[:, H:2 * H])
            gg = jnp.tanh(g[:, 2 * H:3 * H])
            o = jax.nn.sigmoid(g[:, 3 * H:])
            c = f * c + i * gg
            h = o * jnp.tanh(c)
            outs.append(h)
        return jnp.stack(outs, axis=1)

    out0 = lstm_layer(x, params['w_ih0'], params['w_hh0'],
                      params['b_ih0'], params['b_hh0'])
    out1 = lstm_layer(out0, params['w_ih1'], params['w_hh1'],
                      params['b_ih1'], params['b_hh1'])
    last = out1[:, -1, :]
    pred = jnp.dot(last, params['w_fc'].T, precision=hp) + params['b_fc']  # (B, 1)
    res = x[:, -1, 0] - pred[:, 0]
    cvs = []
    prev = jnp.float32(0.0)
    for t in range(B):
        if t == 0:
            v = params['omega'] + params['alpha'] * res[0] ** 2
        else:
            v = (params['omega'] + params['alpha'] * res[t - 1] ** 2
                 + params['beta'] * prev)
        cvs.append(v)
        prev = v
    return pred, jnp.stack(cvs)


if __name__ == "__main__":
    B, T, D, H = 8, 8, 4, 32
    key = jax.random.PRNGKey(0)
    kx, kp = jax.random.split(key)
    x = jax.random.normal(kx, (B, T, D), jnp.float32)
    params = init_params(kp, D, H)

    slab = prepare_params(params, D, B)      # one-time packing, outside the jitted forward
    pred, cv = lstm_garch_forward(x, slab)
    jax.block_until_ready((pred, cv))

    pred_ref, cv_ref = reference_forward(x, params)
    assert pred.shape == (B, 1) and cv.shape == (B,)
    np.testing.assert_allclose(np.asarray(pred), np.asarray(pred_ref),
                               rtol=1e-3, atol=2e-3)
    np.testing.assert_allclose(np.asarray(cv), np.asarray(cv_ref),
                               rtol=1e-3, atol=2e-3)

    print("KERNEL_OK")
</pallas_src>

<mosaic_0001>
module attributes {stable_mosaic.version = 11 : i64} {
  func.func @_lstm_garch_kernel(%arg0: memref<64x4xf32, #tpu.memory_space<vmem>>, %arg1: memref<88x256xf32, #tpu.memory_space<vmem>>, %arg2: memref<8x2xf32, #tpu.memory_space<vmem>>) attributes {dimension_semantics = [], scalar_prefetch = 0 : i64, scratch_operands = 0 : i64, tpu.core_type = #tpu.core_type<tc>} {
    %c0 = arith.constant 0 : index
    %c0_0 = arith.constant 0 : index
    %0 = vector.load %arg1[%c0, %c0_0] : memref<88x256xf32, #tpu.memory_space<vmem>>, vector<4x256xf32>
    %c8 = arith.constant 8 : index
    %c0_1 = arith.constant 0 : index
    %1 = vector.load %arg1[%c8, %c0_1] : memref<88x256xf32, #tpu.memory_space<vmem>>, vector<1x256xf32>
    %c16 = arith.constant 16 : index
    %c0_2 = arith.constant 0 : index
    %2 = vector.load %arg1[%c16, %c0_2] : memref<88x256xf32, #tpu.memory_space<vmem>>, vector<64x256xf32>
    %c80 = arith.constant 80 : index
    %c0_3 = arith.constant 0 : index
    %3 = vector.load %arg1[%c80, %c0_3] : memref<88x256xf32, #tpu.memory_space<vmem>>, vector<8x256xf32>
    %4 = vector.shape_cast %1 : vector<1x256xf32> to vector<1x256xf32>
    %5 = vector.broadcast %4 : vector<1x256xf32> to vector<8x256xf32>
    %c0_4 = arith.constant 0 : index
    %c0_5 = arith.constant 0 : index
    %6 = vector.load %arg0[%c0_4, %c0_5] : memref<64x4xf32, #tpu.memory_space<vmem>>, vector<64x4xf32>
    %cst = arith.constant dense<0.000000e+00> : vector<64x256xf32>
    %7 = tpu.matmul %6, %0, %cst {dimension_numbers = #tpu.dot_dimension_numbers<[1], [0], [0], [1], [0, 0, 1, 1], [], []>} : vector<64x4xf32>, vector<4x256xf32>, vector<64x256xf32> -> vector<64x256xf32>
    %8 = vector.shape_cast %1 : vector<1x256xf32> to vector<1x256xf32>
    %9 = vector.broadcast %8 : vector<1x256xf32> to vector<64x256xf32>
    %10 = arith.addf %7, %9 : vector<64x256xf32>
    %cst_6 = arith.constant 1.000000e+00 : f32
    %11 = vector.broadcast %cst_6 : f32 to vector<1x32xf32>
    %cst_7 = arith.constant 0.000000e+00 : f32
    %12 = vector.broadcast %cst_7 : f32 to vector<1x32xf32>
    %13 = tpu.concatenate %11, %12 in 1 : vector<1x32xf32>, vector<1x32xf32> -> vector<1x64xf32>
    %14 = vector.extract_strided_slice %10 {offsets = [0, 0], sizes = [8, 256], strides = [1, 1]} : vector<64x256xf32> to vector<8x256xf32>
    %15 = math.tanh %14 : vector<8x256xf32>
    %16 = vector.extract_strided_slice %15 {offsets = [0, 0], sizes = [8, 192], strides = [1, 1]} : vector<8x256xf32> to vector<8x192xf32>
    %cst_8 = arith.constant 5.000000e-01 : f32
    %17 = vector.broadcast %cst_8 : f32 to vector<8x192xf32>
    %18 = arith.mulf %17, %16 : vector<8x192xf32>
    %cst_9 = arith.constant 5.000000e-01 : f32
    %19 = vector.broadcast %cst_9 : f32 to vector<8x192xf32>
    %20 = arith.addf %18, %19 : vector<8x192xf32>
    %21 = vector.extract_strided_slice %20 {offsets = [0, 0], sizes = [8, 64], strides = [1, 1]} : vector<8x192xf32> to vector<8x64xf32>
    %22 = vector.extract_strided_slice %20 {offsets = [0, 128], sizes = [8, 64], strides = [1, 1]} : vector<8x192xf32> to vector<8x64xf32>
    %23 = vector.extract_strided_slice %15 {offsets = [0, 192], sizes = [8, 64], strides = [1, 1]} : vector<8x256xf32> to vector<8x64xf32>
    %24 = arith.mulf %21, %23 : vector<8x64xf32>
    %25 = vector.broadcast %13 : vector<1x64xf32> to vector<8x64xf32>
    %26 = arith.mulf %24, %25 : vector<8x64xf32>
    %27 = math.tanh %26 : vector<8x64xf32>
    %28 = arith.mulf %22, %27 : vector<8x64xf32>
    %29 = vector.extract_strided_slice %10 {offsets = [8, 0], sizes = [8, 256], strides = [1, 1]} : vector<64x256xf32> to vector<8x256xf32>
    %cst_10 = arith.constant dense<0.000000e+00> : vector<8x256xf32>
    %30 = tpu.matmul %28, %2, %cst_10 {dimension_numbers = #tpu.dot_dimension_numbers<[1], [0], [0], [1], [0, 0, 1, 1], [], []>} : vector<8x64xf32>, vector<64x256xf32>, vector<8x256xf32> -> vector<8x256xf32>
    %31 = arith.addf %29, %30 : vector<8x256xf32>
    %32 = math.tanh %31 : vector<8x256xf32>
    %33 = vector.extract_strided_slice %32 {offsets = [0, 0], sizes = [8, 192], strides = [1, 1]} : vector<8x256xf32> to vector<8x192xf32>
    %cst_11 = arith.constant 5.000000e-01 : f32
    %34 = vector.broadcast %cst_11 : f32 to vector<8x192xf32>
    %35 = arith.mulf %34, %33 : vector<8x192xf32>
    %cst_12 = arith.constant 5.000000e-01 : f32
    %36 = vector.broadcast %cst_12 : f32 to vector<8x192xf32>
    %37 = arith.addf %35, %36 : vector<8x192xf32>
    %38 = vector.extract_strided_slice %37 {offsets = [0, 0], sizes = [8, 64], strides = [1, 1]} : vector<8x192xf32> to vector<8x64xf32>
    %39 = vector.extract_strided_slice %37 {offsets = [0, 64], sizes = [8, 64], strides = [1, 1]} : vector<8x192xf32> to vector<8x64xf32>
    %40 = vector.extract_strided_slice %37 {offsets = [0, 128], sizes = [8, 64], strides = [1, 1]} : vector<8x192xf32> to vector<8x64xf32>
    %41 = vector.extract_strided_slice %32 {offsets = [0, 192], sizes = [8, 64], strides = [1, 1]} : vector<8x256xf32> to vector<8x64xf32>
    %42 = arith.mulf %39, %26 : vector<8x64xf32>
    %43 = arith.mulf %38, %41 : vector<8x64xf32>
    %44 = arith.addf %42, %43 : vector<8x64xf32>
    %45 = math.tanh %44 : vector<8x64xf32>
    %46 = arith.mulf %40, %45 : vector<8x64xf32>
    %47 = vector.extract_strided_slice %10 {offsets = [16, 0], sizes = [8, 256], strides = [1, 1]} : vector<64x256xf32> to vector<8x256xf32>
    %cst_13 = arith.constant dense<0.000000e+00> : vector<8x256xf32>
    %48 = tpu.matmul %46, %2, %cst_13 {dimension_numbers = #tpu.dot_dimension_numbers<[1], [0], [0], [1], [0, 0, 1, 1], [], []>} : vector<8x64xf32>, vector<64x256xf32>, vector<8x256xf32> -> vector<8x256xf32>
    %49 = arith.addf %47, %48 : vector<8x256xf32>
    %50 = math.tanh %49 : vector<8x256xf32>
    %51 = vector.extract_strided_slice %50 {offsets = [0, 0], sizes = [8, 192], strides = [1, 1]} : vector<8x256xf32> to vector<8x192xf32>
    %cst_14 = arith.constant 5.000000e-01 : f32
    %52 = vector.broadcast %cst_14 : f32 to vector<8x192xf32>
    %53 = arith.mulf %52, %51 : vector<8x192xf32>
    %cst_15 = arith.constant 5.000000e-01 : f32
    %54 = vector.broadcast %cst_15 : f32 to vector<8x192xf32>
    %55 = arith.addf %53, %54 : vector<8x192xf32>
    %56 = vector.extract_strided_slice %55 {offsets = [0, 0], sizes = [8, 64], strides = [1, 1]} : vector<8x192xf32> to vector<8x64xf32>
    %57 = vector.extract_strided_slice %55 {offsets = [0, 64], sizes = [8, 64], strides = [1, 1]} : vector<8x192xf32> to vector<8x64xf32>
    %58 = vector.extract_strided_slice %55 {offsets = [0, 128], sizes = [8, 64], strides = [1, 1]} : vector<8x192xf32> to vector<8x64xf32>
    %59 = vector.extract_strided_slice %50 {offsets = [0, 192], sizes = [8, 64], strides = [1, 1]} : vector<8x256xf32> to vector<8x64xf32>
    %60 = arith.mulf %57, %44 : vector<8x64xf32>
    %61 = arith.mulf %56, %59 : vector<8x64xf32>
    %62 = arith.addf %60, %61 : vector<8x64xf32>
    %63 = math.tanh %62 : vector<8x64xf32>
    %64 = arith.mulf %58, %63 : vector<8x64xf32>
    %65 = vector.extract_strided_slice %10 {offsets = [24, 0], sizes = [8, 256], strides = [1, 1]} : vector<64x256xf32> to vector<8x256xf32>
    %cst_16 = arith.constant dense<0.000000e+00> : vector<8x256xf32>
    %66 = tpu.matmul %64, %2, %cst_16 {dimension_numbers = #tpu.dot_dimension_numbers<[1], [0], [0], [1], [0, 0, 1, 1], [], []>} : vector<8x64xf32>, vector<64x256xf32>, vector<8x256xf32> -> vector<8x256xf32>
    %67 = arith.addf %65, %66 : vector<8x256xf32>
    %68 = math.tanh %67 : vector<8x256xf32>
    %69 = vector.extract_strided_slice %68 {offsets = [0, 0], sizes = [8, 192], strides = [1, 1]} : vector<8x256xf32> to vector<8x192xf32>
    %cst_17 = arith.constant 5.000000e-01 : f32
    %70 = vector.broadcast %cst_17 : f32 to vector<8x192xf32>
    %71 = arith.mulf %70, %69 : vector<8x192xf32>
    %cst_18 = arith.constant 5.000000e-01 : f32
    %72 = vector.broadcast %cst_18 : f32 to vector<8x192xf32>
    %73 = arith.addf %71, %72 : vector<8x192xf32>
    %74 = vector.extract_strided_slice %73 {offsets = [0, 0], sizes = [8, 64], strides = [1, 1]} : vector<8x192xf32> to vector<8x64xf32>
    %75 = vector.extract_strided_slice %73 {offsets = [0, 64], sizes = [8, 64], strides = [1, 1]} : vector<8x192xf32> to vector<8x64xf32>
    %76 = vector.extract_strided_slice %73 {offsets = [0, 128], sizes = [8, 64], strides = [1, 1]} : vector<8x192xf32> to vector<8x64xf32>
    %77 = vector.extract_strided_slice %68 {offsets = [0, 192], sizes = [8, 64], strides = [1, 1]} : vector<8x256xf32> to vector<8x64xf32>
    %78 = arith.mulf %75, %62 : vector<8x64xf32>
    %79 = arith.mulf %74, %77 : vector<8x64xf32>
    %80 = arith.addf %78, %79 : vector<8x64xf32>
    %81 = math.tanh %80 : vector<8x64xf32>
    %82 = arith.mulf %76, %81 : vector<8x64xf32>
    %83 = vector.extract_strided_slice %10 {offsets = [32, 0], sizes = [8, 256], strides = [1, 1]} : vector<64x256xf32> to vector<8x256xf32>
    %cst_19 = arith.constant dense<0.000000e+00> : vector<8x256xf32>
    %84 = tpu.matmul %82, %2, %cst_19 {dimension_numbers = #tpu.dot_dimension_numbers<[1], [0], [0], [1], [0, 0, 1, 1], [], []>} : vector<8x64xf32>, vector<64x256xf32>, vector<8x256xf32> -> vector<8x256xf32>
    %85 = arith.addf %83, %84 : vector<8x256xf32>
    %86 = math.tanh %85 : vector<8x256xf32>
    %87 = vector.extract_strided_slice %86 {offsets = [0, 0], sizes = [8, 192], strides = [1, 1]} : vector<8x256xf32> to vector<8x192xf32>
    %cst_20 = arith.constant 5.000000e-01 : f32
    %88 = vector.broadcast %cst_20 : f32 to vector<8x192xf32>
    %89 = arith.mulf %88, %87 : vector<8x192xf32>
    %cst_21 = arith.constant 5.000000e-01 : f32
    %90 = vector.broadcast %cst_21 : f32 to vector<8x192xf32>
    %91 = arith.addf %89, %90 : vector<8x192xf32>
    %92 = vector.extract_strided_slice %91 {offsets = [0, 0], sizes = [8, 64], strides = [1, 1]} : vector<8x192xf32> to vector<8x64xf32>
    %93 = vector.extract_strided_slice %91 {offsets = [0, 64], sizes = [8, 64], strides = [1, 1]} : vector<8x192xf32> to vector<8x64xf32>
    %94 = vector.extract_strided_slice %91 {offsets = [0, 128], sizes = [8, 64], strides = [1, 1]} : vector<8x192xf32> to vector<8x64xf32>
    %95 = vector.extract_strided_slice %86 {offsets = [0, 192], sizes = [8, 64], strides = [1, 1]} : vector<8x256xf32> to vector<8x64xf32>
    %96 = arith.mulf %93, %80 : vector<8x64xf32>
    %97 = arith.mulf %92, %95 : vector<8x64xf32>
    %98 = arith.addf %96, %97 : vector<8x64xf32>
    %99 = math.tanh %98 : vector<8x64xf32>
    %100 = arith.mulf %94, %99 : vector<8x64xf32>
    %101 = vector.extract_strided_slice %10 {offsets = [40, 0], sizes = [8, 256], strides = [1, 1]} : vector<64x256xf32> to vector<8x256xf32>
    %cst_22 = arith.constant dense<0.000000e+00> : vector<8x256xf32>
    %102 = tpu.matmul %100, %2, %cst_22 {dimension_numbers = #tpu.dot_dimension_numbers<[1], [0], [0], [1], [0, 0, 1, 1], [], []>} : vector<8x64xf32>, vector<64x256xf32>, vector<8x256xf32> -> vector<8x256xf32>
    %103 = arith.addf %101, %102 : vector<8x256xf32>
    %104 = math.tanh %103 : vector<8x256xf32>
    %105 = vector.extract_strided_slice %104 {offsets = [0, 0], sizes = [8, 192], strides = [1, 1]} : vector<8x256xf32> to vector<8x192xf32>
    %cst_23 = arith.constant 5.000000e-01 : f32
    %106 = vector.broadcast %cst_23 : f32 to vector<8x192xf32>
    %107 = arith.mulf %106, %105 : vector<8x192xf32>
    %cst_24 = arith.constant 5.000000e-01 : f32
    %108 = vector.broadcast %cst_24 : f32 to vector<8x192xf32>
    %109 = arith.addf %107, %108 : vector<8x192xf32>
    %110 = vector.extract_strided_slice %109 {offsets = [0, 0], sizes = [8, 64], strides = [1, 1]} : vector<8x192xf32> to vector<8x64xf32>
    %111 = vector.extract_strided_slice %109 {offsets = [0, 64], sizes = [8, 64], strides = [1, 1]} : vector<8x192xf32> to vector<8x64xf32>
    %112 = vector.extract_strided_slice %109 {offsets = [0, 128], sizes = [8, 64], strides = [1, 1]} : vector<8x192xf32> to vector<8x64xf32>
    %113 = vector.extract_strided_slice %104 {offsets = [0, 192], sizes = [8, 64], strides = [1, 1]} : vector<8x256xf32> to vector<8x64xf32>
    %114 = arith.mulf %111, %98 : vector<8x64xf32>
    %115 = arith.mulf %110, %113 : vector<8x64xf32>
    %116 = arith.addf %114, %115 : vector<8x64xf32>
    %117 = math.tanh %116 : vector<8x64xf32>
    %118 = arith.mulf %112, %117 : vector<8x64xf32>
    %119 = vector.extract_strided_slice %10 {offsets = [48, 0], sizes = [8, 256], strides = [1, 1]} : vector<64x256xf32> to vector<8x256xf32>
    %cst_25 = arith.constant dense<0.000000e+00> : vector<8x256xf32>
    %120 = tpu.matmul %118, %2, %cst_25 {dimension_numbers = #tpu.dot_dimension_numbers<[1], [0], [0], [1], [0, 0, 1, 1], [], []>} : vector<8x64xf32>, vector<64x256xf32>, vector<8x256xf32> -> vector<8x256xf32>
    %121 = arith.addf %119, %120 : vector<8x256xf32>
    %122 = math.tanh %121 : vector<8x256xf32>
    %123 = vector.extract_strided_slice %122 {offsets = [0, 0], sizes = [8, 192], strides = [1, 1]} : vector<8x256xf32> to vector<8x192xf32>
    %cst_26 = arith.constant 5.000000e-01 : f32
    %124 = vector.broadcast %cst_26 : f32 to vector<8x192xf32>
    %125 = arith.mulf %124, %123 : vector<8x192xf32>
    %cst_27 = arith.constant 5.000000e-01 : f32
    %126 = vector.broadcast %cst_27 : f32 to vector<8x192xf32>
    %127 = arith.addf %125, %126 : vector<8x192xf32>
    %128 = vector.extract_strided_slice %127 {offsets = [0, 0], sizes = [8, 64], strides = [1, 1]} : vector<8x192xf32> to vector<8x64xf32>
    %129 = vector.extract_strided_slice %127 {offsets = [0, 64], sizes = [8, 64], strides = [1, 1]} : vector<8x192xf32> to vector<8x64xf32>
    %130 = vector.extract_strided_slice %127 {offsets = [0, 128], sizes = [8, 64], strides = [1, 1]} : vector<8x192xf32> to vector<8x64xf32>
    %131 = vector.extract_strided_slice %122 {offsets = [0, 192], sizes = [8, 64], strides = [1, 1]} : vector<8x256xf32> to vector<8x64xf32>
    %132 = arith.mulf %129, %116 : vector<8x64xf32>
    %133 = arith.mulf %128, %131 : vector<8x64xf32>
    %134 = arith.addf %132, %133 : vector<8x64xf32>
    %135 = math.tanh %134 : vector<8x64xf32>
    %136 = arith.mulf %130, %135 : vector<8x64xf32>
    %137 = vector.extract_strided_slice %10 {offsets = [56, 0], sizes = [8, 256], strides = [1, 1]} : vector<64x256xf32> to vector<8x256xf32>
    %cst_28 = arith.constant dense<0.000000e+00> : vector<8x256xf32>
    %138 = tpu.matmul %136, %2, %cst_28 {dimension_numbers = #tpu.dot_dimension_numbers<[1], [0], [0], [1], [0, 0, 1, 1], [], []>} : vector<8x64xf32>, vector<64x256xf32>, vector<8x256xf32> -> vector<8x256xf32>
    %139 = arith.addf %137, %138 : vector<8x256xf32>
    %140 = math.tanh %139 : vector<8x256xf32>
    %141 = vector.extract_strided_slice %140 {offsets = [0, 0], sizes = [8, 192], strides = [1, 1]} : vector<8x256xf32> to vector<8x192xf32>
    %cst_29 = arith.constant 5.000000e-01 : f32
    %142 = vector.broadcast %cst_29 : f32 to vector<8x192xf32>
    %143 = arith.mulf %142, %141 : vector<8x192xf32>
    %cst_30 = arith.constant 5.000000e-01 : f32
    %144 = vector.broadcast %cst_30 : f32 to vector<8x192xf32>
    %145 = arith.addf %143, %144 : vector<8x192xf32>
    %146 = vector.extract_strided_slice %145 {offsets = [0, 0], sizes = [8, 64], strides = [1, 1]} : vector<8x192xf32> to vector<8x64xf32>
    %147 = vector.extract_strided_slice %145 {offsets = [0, 64], sizes = [8, 64], strides = [1, 1]} : vector<8x192xf32> to vector<8x64xf32>
    %148 = vector.extract_strided_slice %145 {offsets = [0, 128], sizes = [8, 64], strides = [1, 1]} : vector<8x192xf32> to vector<8x64xf32>
    %149 = vector.extract_strided_slice %140 {offsets = [0, 192], sizes = [8, 64], strides = [1, 1]} : vector<8x256xf32> to vector<8x64xf32>
    %150 = arith.mulf %147, %134 : vector<8x64xf32>
    %151 = arith.mulf %146, %149 : vector<8x64xf32>
    %152 = arith.addf %150, %151 : vector<8x64xf32>
    %153 = math.tanh %152 : vector<8x64xf32>
    %154 = arith.mulf %148, %153 : vector<8x64xf32>
    %cst_31 = arith.constant dense<0.000000e+00> : vector<8x256xf32>
    %155 = tpu.matmul %154, %2, %cst_31 {dimension_numbers = #tpu.dot_dimension_numbers<[1], [0], [0], [1], [0, 0, 1, 1], [], []>} : vector<8x64xf32>, vector<64x256xf32>, vector<8x256xf32> -> vector<8x256xf32>
    %156 = arith.addf %5, %155 : vector<8x256xf32>
    %157 = math.tanh %156 : vector<8x256xf32>
    %158 = vector.extract_strided_slice %157 {offsets = [0, 0], sizes = [8, 192], strides = [1, 1]} : vector<8x256xf32> to vector<8x192xf32>
    %cst_32 = arith.constant 5.000000e-01 : f32
    %159 = vector.broadcast %cst_32 : f32 to vector<8x192xf32>
    %160 = arith.mulf %159, %158 : vector<8x192xf32>
    %cst_33 = arith.constant 5.000000e-01 : f32
    %161 = vector.broadcast %cst_33 : f32 to vector<8x192xf32>
    %162 = arith.addf %160, %161 : vector<8x192xf32>
    %163 = vector.extract_strided_slice %162 {offsets = [0, 0], sizes = [8, 64], strides = [1, 1]} : vector<8x192xf32> to vector<8x64xf32>
    %164 = vector.extract_strided_slice %162 {offsets = [0, 64], sizes = [8, 64], strides = [1, 1]} : vector<8x192xf32> to vector<8x64xf32>
    %165 = vector.extract_strided_slice %162 {offsets = [0, 128], sizes = [8, 64], strides = [1, 1]} : vector<8x192xf32> to vector<8x64xf32>
    %166 = vector.extract_strided_slice %157 {offsets = [0, 192], sizes = [8, 64], strides = [1, 1]} : vector<8x256xf32> to vector<8x64xf32>
    %167 = arith.mulf %164, %152 : vector<8x64xf32>
    %168 = arith.mulf %163, %166 : vector<8x64xf32>
    %169 = arith.addf %167, %168 : vector<8x64xf32>
    %170 = math.tanh %169 : vector<8x64xf32>
    %171 = arith.mulf %165, %170 : vector<8x64xf32>
    %172 = vector.extract_strided_slice %171 {offsets = [0, 32], sizes = [8, 32], strides = [1, 1]} : vector<8x64xf32> to vector<8x32xf32>
    %173 = vector.extract_strided_slice %3 {offsets = [0, 128], sizes = [1, 32], strides = [1, 1]} : vector<8x256xf32> to vector<1x32xf32>
    %174 = vector.extract_strided_slice %3 {offsets = [0, 160], sizes = [1, 1], strides = [1, 1]} : vector<8x256xf32> to vector<1x1xf32>
    %175 = vector.broadcast %173 : vector<1x32xf32> to vector<8x32xf32>
    %176 = arith.mulf %172, %175 : vector<8x32xf32>
    %cst_34 = arith.constant dense<0.000000e+00> : vector<8xf32>
    %177 = vector.multi_reduction <add>, %176, %cst_34 [1] : vector<8x32xf32> to vector<8xf32>
    %178 = vector.shape_cast %177 : vector<8xf32> to vector<8x1xf32>
    %179 = vector.broadcast %174 : vector<1x1xf32> to vector<8x1xf32>
    %180 = arith.addf %178, %179 : vector<8x1xf32>
    %c56 = arith.constant 56 : index
    %c0_35 = arith.constant 0 : index
    %181 = vector.load %arg0[%c56, %c0_35] : memref<64x4xf32, #tpu.memory_space<vmem>>, vector<8x1xf32>
    %182 = arith.subf %181, %180 : vector<8x1xf32>
    %183 = arith.mulf %182, %182 : vector<8x1xf32>
    %184 = vector.extract_strided_slice %3 {offsets = [0, 0], sizes = [8, 8], strides = [1, 1]} : vector<8x256xf32> to vector<8x8xf32>
    %cst_36 = arith.constant dense<0.000000e+00> : vector<8x1xf32>
    %185 = tpu.matmul %184, %183, %cst_36 {dimension_numbers = #tpu.dot_dimension_numbers<[1], [0], [0], [1], [0, 0, 1, 1], [], []>} : vector<8x8xf32>, vector<8x1xf32>, vector<8x1xf32> -> vector<8x1xf32>
    %186 = vector.extract_strided_slice %3 {offsets = [0, 8], sizes = [8, 1], strides = [1, 1]} : vector<8x256xf32> to vector<8x1xf32>
    %187 = arith.addf %185, %186 : vector<8x1xf32>
    %188 = tpu.concatenate %180, %187 in 1 : vector<8x1xf32>, vector<8x1xf32> -> vector<8x2xf32>
    %c0_37 = arith.constant 0 : index
    %c0_38 = arith.constant 0 : index
    %189 = vector.load %arg2[%c0_37, %c0_38] : memref<8x2xf32, #tpu.memory_space<vmem>>, vector<8x2xf32>
    tpu.vector_store %arg2[%c0_37, %c0_38], %188 {strides = array<i32>} : memref<8x2xf32, #tpu.memory_space<vmem>>, vector<8x2xf32>,
    return
  }
}

</mosaic_0001>

<llo_original>
// kernel: lstm_garch_forward.1
$region0: #{lstm_garch_forward.1}
  #allocation0 [shape = 'u32[]', space=smem, size = 0x4, offset = 0x4, fixed_abs, tag = 'smem constant byte address 0x4 - core index']
  #allocation1 [shape = 'u32[144,128]{1,0:T(1,128)}', space=vmem, size = 0x12000, scoped, tag = 'internal scratch']
  %s0 = inlined_call_operand.vmem [shape: f32[64,4], index: 0, kind: input, shape index: {}]
  %s1 = inlined_call_operand.hbm [shape: f32[88,256], index: 1, kind: input, shape index: {}]
  %s2 = inlined_call_operand.vmem [shape: f32[8,2], index: 2, kind: output, shape index: {}]
  %s3 = sld [smem:[#allocation0]]
  $region22: #{lstm_garch_forward.1} parent=0
    _
  %s5 = ssub.s32 1, %s3
  %s6 = scalar_select 0, %s5, %s3
  $region1: #{lstm_garch_forward.1} parent=0
    #allocation2 [shape = 'u8[90112]{0}', space=vmem, size = 0x16000, scoped, tag = 'input window, operand 1, single buffered']
    #allocation3 [shape = 's32[1]{0}', space=sflag, size = 0x4, scoped, tag = 'scoped memory for lstm_garch_forward.1']
    %7 = vsyncpa [#allocation3], 0
    // Predicated region
    $region2: #{lstm_garch_forward.1} parent=1 // pred_check
      _
    $region3: #{lstm_garch_forward.1} parent=1 // pred_check_branch
      %9 = sbr.rel (0) target = $region5
    $region4: #{lstm_garch_forward.1} parent=1 // pred_region
      _
    $region5: #{lstm_garch_forward.1} parent=1 // pred_fallthru
      _
    // Predicated region
    $region6: #{lstm_garch_forward.1} parent=1 // pred_check
      _
    $region7: #{lstm_garch_forward.1} parent=1 // pred_check_branch
      %11 = sbr.rel (0) target = $region9
    $region8: #{lstm_garch_forward.1} parent=1 // pred_region
      %s13 = ssub.s32 2816, 2816
      %14 = vsyncadd [#allocation3], %s13
      %s15 = sshll.u32 [#allocation2], 4
      %s16 = int_to_ptr.vmem [resolvable:$true] %s15
      %21 = dma.hbm_to_vmem [thread:$0]  %s1, 2816, %s16, [#allocation3], 256, 256, 16
    $region9: #{lstm_garch_forward.1} parent=1 // pred_fallthru
      _
    // Predicated region
    $region10: #{lstm_garch_forward.1} parent=1 // pred_check
      _
    $region11: #{lstm_garch_forward.1} parent=1 // pred_check_branch
      %23 = sbr.rel (0) target = $region13
    $region12: #{lstm_garch_forward.1} parent=1 // pred_region
      %24 = dma.done [#allocation3], 2816
    $region13: #{lstm_garch_forward.1} parent=1 // pred_fallthru
      _
    %v25 = vld [vmem:[#allocation2] sm:$0xf]
    %v26 = vld [vmem:[#allocation2 + $0x8] sm:$0xf]
    %s27 = scalar_lea.vmem [#allocation2], 16
    %v28 = vld [vmem:[%s27] ss:$8 sm:$0x3]
    %v29 = vld [vmem:[#allocation2 + $0x20] sm:$0xff]
    %v30 = vld [vmem:[#allocation2 + $0x28] sm:$0xff]
    %v31 = vld [vmem:[#allocation2 + $0x30] sm:$0xff]
    %v32 = vld [vmem:[#allocation2 + $0x38] sm:$0xff]
    %v33 = vld [vmem:[#allocation2 + $0x40] sm:$0xff]
    %v34 = vld [vmem:[#allocation2 + $0x48] sm:$0xff]
    %v35 = vld [vmem:[#allocation2 + $0x50] sm:$0xff]
    %v36 = vld [vmem:[#allocation2 + $0x58] sm:$0xff]
    %v37 = vld [vmem:[#allocation2 + $0x60] sm:$0xff]
    %v38 = vld [vmem:[#allocation2 + $0x68] sm:$0xff]
    %v39 = vld [vmem:[#allocation2 + $0x70] sm:$0xff]
    %v40 = vld [vmem:[#allocation2 + $0x78] sm:$0xff]
    %v41 = vld [vmem:[#allocation2 + $0x80] sm:$0xff]
    %v42 = vld [vmem:[#allocation2 + $0x88] sm:$0xff]
    %v43 = vld [vmem:[#allocation2 + $0x90] sm:$0xff]
    %v44 = vld [vmem:[#allocation2 + $0x98] sm:$0xff]
    %v45 = vld [vmem:[#allocation2 + $0xa0] sm:$0xff]
    %v46 = vld [vmem:[#allocation2 + $0xa8] sm:$0xff]
    %v48 = vlaneseq
    %v49 = vshrl.u32 %v48, 7
    %v50 = vsub.s32 0, %v49
    %v51 = vrot.slane %v28, %v50
    %v52 = vlaneseq
    %v53 = vshrl.u32 %v52, 7
    %v54 = vsub.s32 1, %v53
    %v55 = vrot.slane %v28, %v54
    %v58 = vld [vmem:[%s0] sm:$0xff]
    %v59 = vld [vmem:[%s0 + $0x8] sm:$0xff]
    %v60 = vld [vmem:[%s0 + $0x10] sm:$0xff]
    %v61 = vld [vmem:[%s0 + $0x18] sm:$0xff]
    %v62 = vld [vmem:[%s0 + $0x20] sm:$0xff]
    %v63 = vld [vmem:[%s0 + $0x28] sm:$0xff]
    %v64 = vld [vmem:[%s0 + $0x30] sm:$0xff]
    %v65 = vld [vmem:[%s0 + $0x38] sm:$0xff]
    %vm66 = vcmask 31744
    %v68 = vsel %vm66, %v58, 0
    %v71 = vsel %vm66, %v59, 0
    %v74 = vsel %vm66, %v60, 0
    %v77 = vsel %vm66, %v61, 0
    %v80 = vsel %vm66, %v62, 0
    %v83 = vsel %vm66, %v63, 0
    %v86 = vsel %vm66, %v64, 0
    %v89 = vsel %vm66, %v65, 0
    %vm91 = vcmask 1043456
    %v93 = vsel %vm91, %v25, 0
    %v96 = vsel %vm91, %v26, 0
    %98 = vmatprep.subr.mxu0 0.0
    %99 = vmatpush1.msra.mxu0 0.0
    %100 = vmatprep.subr.mxu0 0.0
    %101 = vmatpush1.msra.mxu0 0.0
    %102 = vmatprep.subr.mxu0 0.0
    %103 = vmatpush1.msra.mxu0 0.0
    %104 = vmatprep.subr.mxu0 0.0
    %105 = vmatpush1.msra.mxu0 0.0
    %106 = vmatprep.subr.mxu0 0.0
    %107 = vmatpush1.msra.mxu0 0.0
    %108 = vmatprep.subr.mxu0 0.0
    %109 = vmatpush1.msra.mxu0 0.0
    %110 = vmatprep.subr.mxu0 0.0
    %111 = vmatpush1.msra.mxu0 0.0
    %112 = vmatprep.subr.mxu0 0.0
    %113 = vmatpush1.msra.mxu0 0.0
    %114 = vmatprep.subr.mxu0 0.0
    %115 = vmatpush1.msra.mxu0 0.0
    %116 = vmatprep.subr.mxu0 0.0
    %117 = vmatpush1.msra.mxu0 0.0
    %118 = vmatprep.subr.mxu0 0.0
    %119 = vmatpush1.msra.mxu0 0.0
    %120 = vmatprep.subr.mxu0 0.0
    %121 = vmatpush1.msra.mxu0 0.0
    %122 = vmatprep.subr.mxu0 0.0
    %123 = vmatpush1.msra.mxu0 0.0
    %124 = vmatprep.subr.mxu0 0.0
    %125 = vmatpush1.msra.mxu0 0.0
    %126 = vmatprep.subr.mxu0 0.0
    %127 = vmatpush1.msra.mxu0 0.0
    %128 = vmatprep.subr.mxu0 %v96
    %129 = vmatpush1.msra.mxu0 %v93
    %130 = vmatprep.subr.mxu0 0.0
    %131 = vmatpush2.msra.mxu0 0.0
    %132 = vmatprep.subr.mxu0 0.0
    %133 = vmatpush2.msra.mxu0 0.0
    %134 = vmatprep.subr.mxu0 0.0
    %135 = vmatpush2.msra.mxu0 0.0
    %136 = vmatprep.subr.mxu0 0.0
    %137 = vmatpush2.msra.mxu0 0.0
    %138 = vmatprep.subr.mxu0 0.0
    %139 = vmatpush2.msra.mxu0 0.0
    %140 = vmatprep.subr.mxu0 0.0
    %141 = vmatpush2.msra.mxu0 0.0
    %142 = vmatprep.subr.mxu0 0.0
    %143 = vmatpush2.msra.mxu0 0.0
    %144 = vmatprep.subr.mxu0 0.0
    %145 = vmatpush2.msra.mxu0 0.0
    %146 = vmatprep.subr.mxu0 0.0
    %147 = vmatpush2.msra.mxu0 0.0
    %148 = vmatprep.subr.mxu0 0.0
    %149 = vmatpush2.msra.mxu0 0.0
    %150 = vmatprep.subr.mxu0 0.0
    %151 = vmatpush2.msra.mxu0 0.0
    %152 = vmatprep.subr.mxu0 0.0
    %153 = vmatpush2.msra.mxu0 0.0
    %154 = vmatprep.subr.mxu0 0.0
    %155 = vmatpush2.msra.mxu0 0.0
    %156 = vmatprep.subr.mxu0 0.0
    %157 = vmatpush2.msra.mxu0 0.0
    %158 = vmatprep.subr.mxu0 0.0
    %159 = vmatpush2.msra.mxu0 0.0
    %160 = vmatprep.subr.mxu0 0.0
    %161 = vmatpush2.msra.mxu0 0.0
    %162 = vmatprep.mubr.f32.mxu0 0.0
    %163 = vmatmul.mubr.f32.gmra.mxu0 %v68
    %v164 = vpop.f32.mrf.mxu0
    %v165 = vadd.f32 %v51, %v164
    %v166 = vpop.f32.mrf.mxu0
    %v167 = vadd.f32 %v55, %v166
    %168 = vmatprep.mubr.f32.mxu0 0.0
    %169 = vmatmul.mubr.f32.gmra.mxu0 %v71
    %v170 = vpop.f32.mrf.mxu0
    %v171 = vadd.f32 %v51, %v170
    %v172 = vpop.f32.mrf.mxu0
    %v173 = vadd.f32 %v55, %v172
    %174 = vmatprep.mubr.f32.mxu0 0.0
    %175 = vmatmul.mubr.f32.gmra.mxu0 %v74
    %v176 = vpop.f32.mrf.mxu0
    %v177 = vadd.f32 %v51, %v176
    %v178 = vpop.f32.mrf.mxu0
    %v179 = vadd.f32 %v55, %v178
    %180 = vmatprep.mubr.f32.mxu0 0.0
    %181 = vmatmul.mubr.f32.gmra.mxu0 %v77
    %v182 = vpop.f32.mrf.mxu0
    %v183 = vadd.f32 %v51, %v182
    %v184 = vpop.f32.mrf.mxu0
    %v185 = vadd.f32 %v55, %v184
    %186 = vmatprep.mubr.f32.mxu0 0.0
    %187 = vmatmul.mubr.f32.gmra.mxu0 %v80
    %v188 = vpop.f32.mrf.mxu0
    %v189 = vadd.f32 %v51, %v188
    %v190 = vpop.f32.mrf.mxu0
    %v191 = vadd.f32 %v55, %v190
    %192 = vmatprep.mubr.f32.mxu0 0.0
    %193 = vmatmul.mubr.f32.gmra.mxu0 %v83
    %v194 = vpop.f32.mrf.mxu0
    %v195 = vadd.f32 %v51, %v194
    %v196 = vpop.f32.mrf.mxu0
    %v197 = vadd.f32 %v55, %v196
    %198 = vmatprep.mubr.f32.mxu0 0.0
    %199 = vmatmul.mubr.f32.gmra.mxu0 %v86
    %v200 = vpop.f32.mrf.mxu0
    %v201 = vadd.f32 %v51, %v200
    %v202 = vpop.f32.mrf.mxu0
    %v203 = vadd.f32 %v55, %v202
    %204 = vmatprep.mubr.f32.mxu0 0.0
    %205 = vmatmul.mubr.f32.gmra.mxu0 %v89
    %v206 = vpop.f32.mrf.mxu0
    %v207 = vadd.f32 %v51, %v206
    %v208 = vpop.f32.mrf.mxu0
    %v209 = vadd.f32 %v55, %v208
    %210 = vdwg.mxu0
    %vm211 = vcmask 261120
    %v212 = vsel %vm211, 1.0, 0.0
    %v213 = vtanh.pop %v165
    %v214 = vtanh.pop %v167
    %v215 = vmul.f32 %v213, 0.5
    %v216 = vmul.f32 %v214, 0.5
    %v217 = vadd.f32 %v215, 0.5
    %v218 = vadd.f32 %v216, 0.5
    %220 = vrot.lane.b32.xlu0 %v214, 64
    %v221 = vpop.permute.xlu0 %220
    %v223 = vmul.f32 %v217, %v221
    %v224 = vlaneseq
    %v225 = vshrl.u32 %v224, 7
    %v226 = vsub.s32 0, %v225
    %v227 = vrot.slane %v212, %v226
    %v228 = vmul.f32 %v223, %v227
    %v229 = vtanh.pop %v228
    %v230 = vmul.f32 %v218, %v229
    %vm231 = vcmask 523264
    %v233 = vsel %vm231, %v230, 0
    %235 = vmatprep.subr.mxu0 0.0
    %236 = vmatpush1.msra.mxu0 0.0
    %237 = vmatprep.subr.mxu0 0.0
    %238 = vmatpush1.msra.mxu0 0.0
    %239 = vmatprep.subr.mxu0 0.0
    %240 = vmatpush1.msra.mxu0 0.0
    %241 = vmatprep.subr.mxu0 0.0
    %242 = vmatpush1.msra.mxu0 0.0
    %243 = vmatprep.subr.mxu0 0.0
    %244 = vmatpush1.msra.mxu0 0.0
    %245 = vmatprep.subr.mxu0 0.0
    %246 = vmatpush1.msra.mxu0 0.0
    %247 = vmatprep.subr.mxu0 0.0
    %248 = vmatpush1.msra.mxu0 0.0
    %249 = vmatprep.subr.mxu0 0.0
    %250 = vmatpush1.msra.mxu0 0.0
    %251 = vmatprep.subr.mxu0 %v44
    %252 = vmatpush1.msra.mxu0 %v43
    %253 = vmatprep.subr.mxu0 %v42
    %254 = vmatpush1.msra.mxu0 %v41
    %255 = vmatprep.subr.mxu0 %v40
    %256 = vmatpush1.msra.mxu0 %v39
    %257 = vmatprep.subr.mxu0 %v38
    %258 = vmatpush1.msra.mxu0 %v37
    %259 = vmatprep.subr.mxu0 %v36
    %260 = vmatpush1.msra.mxu0 %v35
    %261 = vmatprep.subr.mxu0 %v34
    %262 = vmatpush1.msra.mxu0 %v33
    %263 = vmatprep.subr.mxu0 %v32
    %264 = vmatpush1.msra.mxu0 %v31
    %265 = vmatprep.subr.mxu0 %v30
    %266 = vmatpush1.msra.mxu0 %v29
    %267 = vmatprep.subr.mxu0 0.0
    %268 = vmatpush2.msra.mxu0 0.0
    %269 = vmatprep.subr.mxu0 0.0
    %270 = vmatpush2.msra.mxu0 0.0
    %271 = vmatprep.subr.mxu0 0.0
    %272 = vmatpush2.msra.mxu0 0.0
    %273 = vmatprep.subr.mxu0 0.0
    %274 = vmatpush2.msra.mxu0 0.0
    %275 = vmatprep.subr.mxu0 0.0
    %276 = vmatpush2.msra.mxu0 0.0
    %277 = vmatprep.subr.mxu0 0.0
    %278 = vmatpush2.msra.mxu0 0.0
    %279 = vmatprep.subr.mxu0 0.0
    %280 = vmatpush2.msra.mxu0 0.0
    %281 = vmatprep.subr.mxu0 0.0
    %282 = vmatpush2.msra.mxu0 0.0
    %283 = vmatprep.subr.mxu0 0.0
    %284 = vmatpush2.msra.mxu0 0.0
    %285 = vmatprep.subr.mxu0 0.0
    %286 = vmatpush2.msra.mxu0 0.0
    %287 = vmatprep.subr.mxu0 0.0
    %288 = vmatpush2.msra.mxu0 0.0
    %289 = vmatprep.subr.mxu0 0.0
    %290 = vmatpush2.msra.mxu0 0.0
    %291 = vmatprep.subr.mxu0 0.0
    %292 = vmatpush2.msra.mxu0 0.0
    %293 = vmatprep.subr.mxu0 0.0
    %294 = vmatpush2.msra.mxu0 0.0
    %295 = vmatprep.subr.mxu0 0.0
    %296 = vmatpush2.msra.mxu0 0.0
    %297 = vmatprep.subr.mxu0 0.0
    %298 = vmatpush2.msra.mxu0 0.0
    %299 = vmatprep.mubr.f32.mxu0 0.0
    %300 = vmatmul.mubr.f32.gmra.mxu0 %v233
    %v301 = vpop.f32.mrf.mxu0
    %v302 = vadd.f32 0.0, %v301
    %v303 = vpop.f32.mrf.mxu0
    %v304 = vadd.f32 0.0, %v303
    %305 = vdwg.mxu0
    %v306 = vadd.f32 %v171, %v302
    %v307 = vadd.f32 %v173, %v304
    %v308 = vtanh.pop %v306
    %v309 = vtanh.pop %v307
    %v310 = vmul.f32 %v308, 0.5
    %v311 = vmul.f32 %v309, 0.5
    %v312 = vadd.f32 %v310, 0.5
    %v313 = vadd.f32 %v311, 0.5
    %315 = vrot.lane.b32.xlu0 %v228, 64
    %v316 = vpop.permute.xlu0 %315
    %v318 = vmul.f32 %v312, %v316
    %320 = vrot.lane.b32.xlu0 %v309, 64
    %v321 = vpop.permute.xlu0 %320
    %v323 = vmul.f32 %v312, %v321
    %325 = vrot.lane.b32.xlu0 %v323, 64
    %v326 = vpop.permute.xlu0 %325
    %v328 = vadd.f32 %v318, %v326
    %v329 = vtanh.pop %v328
    %331 = vrot.lane.b32.xlu0 %v329, 64
    %v332 = vpop.permute.xlu0 %331
    %v334 = vmul.f32 %v313, %v332
    %v336 = vsel %vm231, %v334, 0
    %338 = vmatprep.subr.mxu0 0.0
    %339 = vmatpush1.msra.mxu0 0.0
    %340 = vmatprep.subr.mxu0 0.0
    %341 = vmatpush1.msra.mxu0 0.0
    %342 = vmatprep.subr.mxu0 0.0
    %343 = vmatpush1.msra.mxu0 0.0
    %344 = vmatprep.subr.mxu0 0.0
    %345 = vmatpush1.msra.mxu0 0.0
    %346 = vmatprep.subr.mxu0 0.0
    %347 = vmatpush1.msra.mxu0 0.0
    %348 = vmatprep.subr.mxu0 0.0
    %349 = vmatpush1.msra.mxu0 0.0
    %350 = vmatprep.subr.mxu0 0.0
    %351 = vmatpush1.msra.mxu0 0.0
    %352 = vmatprep.subr.mxu0 0.0
    %353 = vmatpush1.msra.mxu0 0.0
    %354 = vmatprep.subr.mxu0 %v44
    %355 = vmatpush1.msra.mxu0 %v43
    %356 = vmatprep.subr.mxu0 %v42
    %357 = vmatpush1.msra.mxu0 %v41
    %358 = vmatprep.subr.mxu0 %v40
    %359 = vmatpush1.msra.mxu0 %v39
    %360 = vmatprep.subr.mxu0 %v38
    %361 = vmatpush1.msra.mxu0 %v37
    %362 = vmatprep.subr.mxu0 %v36
    %363 = vmatpush1.msra.mxu0 %v35
    %364 = vmatprep.subr.mxu0 %v34
    %365 = vmatpush1.msra.mxu0 %v33
    %366 = vmatprep.subr.mxu0 %v32
    %367 = vmatpush1.msra.mxu0 %v31
    %368 = vmatprep.subr.mxu0 %v30
    %369 = vmatpush1.msra.mxu0 %v29
    %370 = vmatprep.subr.mxu0 0.0
    %371 = vmatpush2.msra.mxu0 0.0
    %372 = vmatprep.subr.mxu0 0.0
    %373 = vmatpush2.msra.mxu0 0.0
    %374 = vmatprep.subr.mxu0 0.0
    %375 = vmatpush2.msra.mxu0 0.0
    %376 = vmatprep.subr.mxu0 0.0
    %377 = vmatpush2.msra.mxu0 0.0
    %378 = vmatprep.subr.mxu0 0.0
    %379 = vmatpush2.msra.mxu0 0.0
    %380 = vmatprep.subr.mxu0 0.0
    %381 = vmatpush2.msra.mxu0 0.0
    %382 = vmatprep.subr.mxu0 0.0
    %383 = vmatpush2.msra.mxu0 0.0
    %384 = vmatprep.subr.mxu0 0.0
    %385 = vmatpush2.msra.mxu0 0.0
    %386 = vmatprep.subr.mxu0 0.0
    %387 = vmatpush2.msra.mxu0 0.0
    %388 = vmatprep.subr.mxu0 0.0
    %389 = vmatpush2.msra.mxu0 0.0
    %390 = vmatprep.subr.mxu0 0.0
    %391 = vmatpush2.msra.mxu0 0.0
    %392 = vmatprep.subr.mxu0 0.0
    %393 = vmatpush2.msra.mxu0 0.0
    %394 = vmatprep.subr.mxu0 0.0
    %395 = vmatpush2.msra.mxu0 0.0
    %396 = vmatprep.subr.mxu0 0.0
    %397 = vmatpush2.msra.mxu0 0.0
    %398 = vmatprep.subr.mxu0 0.0
    %399 = vmatpush2.msra.mxu0 0.0
    %400 = vmatprep.subr.mxu0 0.0
    %401 = vmatpush2.msra.mxu0 0.0
    %402 = vmatprep.mubr.f32.mxu0 0.0
    %403 = vmatmul.mubr.f32.gmra.mxu0 %v336
    %v404 = vpop.f32.mrf.mxu0
    %v405 = vadd.f32 0.0, %v404
    %v406 = vpop.f32.mrf.mxu0
    %v407 = vadd.f32 0.0, %v406
    %408 = vdwg.mxu0
    %v409 = vadd.f32 %v177, %v405
    %v410 = vadd.f32 %v179, %v407
    %v411 = vtanh.pop %v409
    %v412 = vtanh.pop %v410
    %v413 = vmul.f32 %v411, 0.5
    %v414 = vmul.f32 %v412, 0.5
    %v415 = vadd.f32 %v413, 0.5
    %v416 = vadd.f32 %v414, 0.5
    %v417 = vmul.f32 %v415, %v328
    %419 = vrot.lane.b32.xlu0 %v412, 64
    %v420 = vpop.permute.xlu0 %419
    %v422 = vmul.f32 %v415, %v420
    %424 = vrot.lane.b32.xlu0 %v422, 64
    %v425 = vpop.permute.xlu0 %424
    %v427 = vadd.f32 %v417, %v425
    %v428 = vtanh.pop %v427
    %430 = vrot.lane.b32.xlu0 %v428, 64
    %v431 = vpop.permute.xlu0 %430
    %v433 = vmul.f32 %v416, %v431
    %v435 = vsel %vm231, %v433, 0
    %437 = vmatprep.subr.mxu0 0.0
    %438 = vmatpush1.msra.mxu0 0.0
    %439 = vmatprep.subr.mxu0 0.0
    %440 = vmatpush1.msra.mxu0 0.0
    %441 = vmatprep.subr.mxu0 0.0
    %442 = vmatpush1.msra.mxu0 0.0
    %443 = vmatprep.subr.mxu0 0.0
    %444 = vmatpush1.msra.mxu0 0.0
    %445 = vmatprep.subr.mxu0 0.0
    %446 = vmatpush1.msra.mxu0 0.0
    %447 = vmatprep.subr.mxu0 0.0
    %448 = vmatpush1.msra.mxu0 0.0
    %449 = vmatprep.subr.mxu0 0.0
    %450 = vmatpush1.msra.mxu0 0.0
    %451 = vmatprep.subr.mxu0 0.0
    %452 = vmatpush1.msra.mxu0 0.0
    %453 = vmatprep.subr.mxu0 %v44
    %454 = vmatpush1.msra.mxu0 %v43
    %455 = vmatprep.subr.mxu0 %v42
    %456 = vmatpush1.msra.mxu0 %v41
    %457 = vmatprep.subr.mxu0 %v40
    %458 = vmatpush1.msra.mxu0 %v39
    %459 = vmatprep.subr.mxu0 %v38
    %460 = vmatpush1.msra.mxu0 %v37
    %461 = vmatprep.subr.mxu0 %v36
    %462 = vmatpush1.msra.mxu0 %v35
    %463 = vmatprep.subr.mxu0 %v34
    %464 = vmatpush1.msra.mxu0 %v33
    %465 = vmatprep.subr.mxu0 %v32
    %466 = vmatpush1.msra.mxu0 %v31
    %467 = vmatprep.subr.mxu0 %v30
    %468 = vmatpush1.msra.mxu0 %v29
    %469 = vmatprep.subr.mxu0 0.0
    %470 = vmatpush2.msra.mxu0 0.0
    %471 = vmatprep.subr.mxu0 0.0
    %472 = vmatpush2.msra.mxu0 0.0
    %473 = vmatprep.subr.mxu0 0.0
    %474 = vmatpush2.msra.mxu0 0.0
    %475 = vmatprep.subr.mxu0 0.0
    %476 = vmatpush2.msra.mxu0 0.0
    %477 = vmatprep.subr.mxu0 0.0
    %478 = vmatpush2.msra.mxu0 0.0
    %479 = vmatprep.subr.mxu0 0.0
    %480 = vmatpush2.msra.mxu0 0.0
    %481 = vmatprep.subr.mxu0 0.0
    %482 = vmatpush2.msra.mxu0 0.0
    %483 = vmatprep.subr.mxu0 0.0
    %484 = vmatpush2.msra.mxu0 0.0
    %485 = vmatprep.subr.mxu0 0.0
    %486 = vmatpush2.msra.mxu0 0.0
    %487 = vmatprep.subr.mxu0 0.0
    %488 = vmatpush2.msra.mxu0 0.0
    %489 = vmatprep.subr.mxu0 0.0
    %490 = vmatpush2.msra.mxu0 0.0
    %491 = vmatprep.subr.mxu0 0.0
    %492 = vmatpush2.msra.mxu0 0.0
    %493 = vmatprep.subr.mxu0 0.0
    %494 = vmatpush2.msra.mxu0 0.0
    %495 = vmatprep.subr.mxu0 0.0
    %496 = vmatpush2.msra.mxu0 0.0
    %497 = vmatprep.subr.mxu0 0.0
    %498 = vmatpush2.msra.mxu0 0.0
    %499 = vmatprep.subr.mxu0 0.0
    %500 = vmatpush2.msra.mxu0 0.0
    %501 = vmatprep.mubr.f32.mxu0 0.0
    %502 = vmatmul.mubr.f32.gmra.mxu0 %v435
    %v503 = vpop.f32.mrf.mxu0
    %v504 = vadd.f32 0.0, %v503
    %v505 = vpop.f32.mrf.mxu0
    %v506 = vadd.f32 0.0, %v505
    %507 = vdwg.mxu0
    %v508 = vadd.f32 %v183, %v504
    %v509 = vadd.f32 %v185, %v506
    %v510 = vtanh.pop %v508
    %v511 = vtanh.pop %v509
    %v512 = vmul.f32 %v510, 0.5
    %v513 = vmul.f32 %v511, 0.5
    %v514 = vadd.f32 %v512, 0.5
    %v515 = vadd.f32 %v513, 0.5
    %v516 = vmul.f32 %v514, %v427
    %518 = vrot.lane.b32.xlu0 %v511, 64
    %v519 = vpop.permute.xlu0 %518
    %v521 = vmul.f32 %v514, %v519
    %523 = vrot.lane.b32.xlu0 %v521, 64
    %v524 = vpop.permute.xlu0 %523
    %v526 = vadd.f32 %v516, %v524
    %v527 = vtanh.pop %v526
    %529 = vrot.lane.b32.xlu0 %v527, 64
    %v530 = vpop.permute.xlu0 %529
    %v532 = vmul.f32 %v515, %v530
    %v534 = vsel %vm231, %v532, 0
    %536 = vmatprep.subr.mxu0 0.0
    %537 = vmatpush1.msra.mxu0 0.0
    %538 = vmatprep.subr.mxu0 0.0
    %539 = vmatpush1.msra.mxu0 0.0
    %540 = vmatprep.subr.mxu0 0.0
    %541 = vmatpush1.msra.mxu0 0.0
    %542 = vmatprep.subr.mxu0 0.0
    %543 = vmatpush1.msra.mxu0 0.0
    %544 = vmatprep.subr.mxu0 0.0
    %545 = vmatpush1.msra.mxu0 0.0
    %546 = vmatprep.subr.mxu0 0.0
    %547 = vmatpush1.msra.mxu0 0.0
    %548 = vmatprep.subr.mxu0 0.0
    %549 = vmatpush1.msra.mxu0 0.0
    %550 = vmatprep.subr.mxu0 0.0
    %551 = vmatpush1.msra.mxu0 0.0
    %552 = vmatprep.subr.mxu0 %v44
    %553 = vmatpush1.msra.mxu0 %v43
    %554 = vmatprep.subr.mxu0 %v42
    %555 = vmatpush1.msra.mxu0 %v41
    %556 = vmatprep.subr.mxu0 %v40
    %557 = vmatpush1.msra.mxu0 %v39
    %558 = vmatprep.subr.mxu0 %v38
    %559 = vmatpush1.msra.mxu0 %v37
    %560 = vmatprep.subr.mxu0 %v36
    %561 = vmatpush1.msra.mxu0 %v35
    %562 = vmatprep.subr.mxu0 %v34
    %563 = vmatpush1.msra.mxu0 %v33
    %564 = vmatprep.subr.mxu0 %v32
    %565 = vmatpush1.msra.mxu0 %v31
    %566 = vmatprep.subr.mxu0 %v30
    %567 = vmatpush1.msra.mxu0 %v29
    %568 = vmatprep.subr.mxu0 0.0
    %569 = vmatpush2.msra.mxu0 0.0
    %570 = vmatprep.subr.mxu0 0.0
    %571 = vmatpush2.msra.mxu0 0.0
    %572 = vmatprep.subr.mxu0 0.0
    %573 = vmatpush2.msra.mxu0 0.0
    %574 = vmatprep.subr.mxu0 0.0
    %575 = vmatpush2.msra.mxu0 0.0
    %576 = vmatprep.subr.mxu0 0.0
    %577 = vmatpush2.msra.mxu0 0.0
    %578 = vmatprep.subr.mxu0 0.0
    %579 = vmatpush2.msra.mxu0 0.0
    %580 = vmatprep.subr.mxu0 0.0
    %581 = vmatpush2.msra.mxu0 0.0
    %582 = vmatprep.subr.mxu0 0.0
    %583 = vmatpush2.msra.mxu0 0.0
    %584 = vmatprep.subr.mxu0 0.0
    %585 = vmatpush2.msra.mxu0 0.0
    %586 = vmatprep.subr.mxu0 0.0
    %587 = vmatpush2.msra.mxu0 0.0
    %588 = vmatprep.subr.mxu0 0.0
    %589 = vmatpush2.msra.mxu0 0.0
    %590 = vmatprep.subr.mxu0 0.0
    %591 = vmatpush2.msra.mxu0 0.0
    %592 = vmatprep.subr.mxu0 0.0
    %593 = vmatpush2.msra.mxu0 0.0
    %594 = vmatprep.subr.mxu0 0.0
    %595 = vmatpush2.msra.mxu0 0.0
    %596 = vmatprep.subr.mxu0 0.0
    %597 = vmatpush2.msra.mxu0 0.0
    %598 = vmatprep.subr.mxu0 0.0
    %599 = vmatpush2.msra.mxu0 0.0
    %600 = vmatprep.mubr.f32.mxu0 0.0
    %601 = vmatmul.mubr.f32.gmra.mxu0 %v534
    %v602 = vpop.f32.mrf.mxu0
    %v603 = vadd.f32 0.0, %v602
    %v604 = vpop.f32.mrf.mxu0
    %v605 = vadd.f32 0.0, %v604
    %606 = vdwg.mxu0
    %v607 = vadd.f32 %v189, %v603
    %v608 = vadd.f32 %v191, %v605
    %v609 = vtanh.pop %v607
    %v610 = vtanh.pop %v608
    %v611 = vmul.f32 %v609, 0.5
    %v612 = vmul.f32 %v610, 0.5
    %v613 = vadd.f32 %v611, 0.5
    %v614 = vadd.f32 %v612, 0.5
    %v615 = vmul.f32 %v613, %v526
    %617 = vrot.lane.b32.xlu0 %v610, 64
    %v618 = vpop.permute.xlu0 %617
    %v620 = vmul.f32 %v613, %v618
    %622 = vrot.lane.b32.xlu0 %v620, 64
    %v623 = vpop.permute.xlu0 %622
    %v625 = vadd.f32 %v615, %v623
    %v626 = vtanh.pop %v625
    %628 = vrot.lane.b32.xlu0 %v626, 64
    %v629 = vpop.permute.xlu0 %628
    %v631 = vmul.f32 %v614, %v629
    %v633 = vsel %vm231, %v631, 0
    %635 = vmatprep.subr.mxu0 0.0
    %636 = vmatpush1.msra.mxu0 0.0
    %637 = vmatprep.subr.mxu0 0.0
    %638 = vmatpush1.msra.mxu0 0.0
    %639 = vmatprep.subr.mxu0 0.0
    %640 = vmatpush1.msra.mxu0 0.0
    %641 = vmatprep.subr.mxu0 0.0
    %642 = vmatpush1.msra.mxu0 0.0
    %643 = vmatprep.subr.mxu0 0.0
    %644 = vmatpush1.msra.mxu0 0.0
    %645 = vmatprep.subr.mxu0 0.0
    %646 = vmatpush1.msra.mxu0 0.0
    %647 = vmatprep.subr.mxu0 0.0
    %648 = vmatpush1.msra.mxu0 0.0
    %649 = vmatprep.subr.mxu0 0.0
    %650 = vmatpush1.msra.mxu0 0.0
    %651 = vmatprep.subr.mxu0 %v44
    %652 = vmatpush1.msra.mxu0 %v43
    %653 = vmatprep.subr.mxu0 %v42
    %654 = vmatpush1.msra.mxu0 %v41
    %655 = vmatprep.subr.mxu0 %v40
    %656 = vmatpush1.msra.mxu0 %v39
    %657 = vmatprep.subr.mxu0 %v38
    %658 = vmatpush1.msra.mxu0 %v37
    %659 = vmatprep.subr.mxu0 %v36
    %660 = vmatpush1.msra.mxu0 %v35
    %661 = vmatprep.subr.mxu0 %v34
    %662 = vmatpush1.msra.mxu0 %v33
    %663 = vmatprep.subr.mxu0 %v32
    %664 = vmatpush1.msra.mxu0 %v31
    %665 = vmatprep.subr.mxu0 %v30
    %666 = vmatpush1.msra.mxu0 %v29
    %667 = vmatprep.subr.mxu0 0.0
    %668 = vmatpush2.msra.mxu0 0.0
    %669 = vmatprep.subr.mxu0 0.0
    %670 = vmatpush2.msra.mxu0 0.0
    %671 = vmatprep.subr.mxu0 0.0
    %672 = vmatpush2.msra.mxu0 0.0
    %673 = vmatprep.subr.mxu0 0.0
    %674 = vmatpush2.msra.mxu0 0.0
    %675 = vmatprep.subr.mxu0 0.0
    %676 = vmatpush2.msra.mxu0 0.0
    %677 = vmatprep.subr.mxu0 0.0
    %678 = vmatpush2.msra.mxu0 0.0
    %679 = vmatprep.subr.mxu0 0.0
    %680 = vmatpush2.msra.mxu0 0.0
    %681 = vmatprep.subr.mxu0 0.0
    %682 = vmatpush2.msra.mxu0 0.0
    %683 = vmatprep.subr.mxu0 0.0
    %684 = vmatpush2.msra.mxu0 0.0
    %685 = vmatprep.subr.mxu0 0.0
    %686 = vmatpush2.msra.mxu0 0.0
    %687 = vmatprep.subr.mxu0 0.0
    %688 = vmatpush2.msra.mxu0 0.0
    %689 = vmatprep.subr.mxu0 0.0
    %690 = vmatpush2.msra.mxu0 0.0
    %691 = vmatprep.subr.mxu0 0.0
    %692 = vmatpush2.msra.mxu0 0.0
    %693 = vmatprep.subr.mxu0 0.0
    %694 = vmatpush2.msra.mxu0 0.0
    %695 = vmatprep.subr.mxu0 0.0
    %696 = vmatpush2.msra.mxu0 0.0
    %697 = vmatprep.subr.mxu0 0.0
    %698 = vmatpush2.msra.mxu0 0.0
    %699 = vmatprep.mubr.f32.mxu0 0.0
    %700 = vmatmul.mubr.f32.gmra.mxu0 %v633
    %v701 = vpop.f32.mrf.mxu0
    %v702 = vadd.f32 0.0, %v701
    %v703 = vpop.f32.mrf.mxu0
    %v704 = vadd.f32 0.0, %v703
    %705 = vdwg.mxu0
    %v706 = vadd.f32 %v195, %v702
    %v707 = vadd.f32 %v197, %v704
    %v708 = vtanh.pop %v706
    %v709 = vtanh.pop %v707
    %v710 = vmul.f32 %v708, 0.5
    %v711 = vmul.f32 %v709, 0.5
    %v712 = vadd.f32 %v710, 0.5
    %v713 = vadd.f32 %v711, 0.5
    %v714 = vmul.f32 %v712, %v625
    %716 = vrot.lane.b32.xlu0 %v709, 64
    %v717 = vpop.permute.xlu0 %716
    %v719 = vmul.f32 %v712, %v717
    %721 = vrot.lane.b32.xlu0 %v719, 64
    %v722 = vpop.permute.xlu0 %721
    %v724 = vadd.f32 %v714, %v722
    %v725 = vtanh.pop %v724
    %727 = vrot.lane.b32.xlu0 %v725, 64
    %v728 = vpop.permute.xlu0 %727
    %v730 = vmul.f32 %v713, %v728
    %v732 = vsel %vm231, %v730, 0
    %734 = vmatprep.subr.mxu0 0.0
    %735 = vmatpush1.msra.mxu0 0.0
    %736 = vmatprep.subr.mxu0 0.0
    %737 = vmatpush1.msra.mxu0 0.0
    %738 = vmatprep.subr.mxu0 0.0
    %739 = vmatpush1.msra.mxu0 0.0
    %740 = vmatprep.subr.mxu0 0.0
    %741 = vmatpush1.msra.mxu0 0.0
    %742 = vmatprep.subr.mxu0 0.0
    %743 = vmatpush1.msra.mxu0 0.0
    %744 = vmatprep.subr.mxu0 0.0
    %745 = vmatpush1.msra.mxu0 0.0
    %746 = vmatprep.subr.mxu0 0.0
    %747 = vmatpush1.msra.mxu0 0.0
    %748 = vmatprep.subr.mxu0 0.0
    %749 = vmatpush1.msra.mxu0 0.0
    %750 = vmatprep.subr.mxu0 %v44
    %751 = vmatpush1.msra.mxu0 %v43
    %752 = vmatprep.subr.mxu0 %v42
    %753 = vmatpush1.msra.mxu0 %v41
    %754 = vmatprep.subr.mxu0 %v40
    %755 = vmatpush1.msra.mxu0 %v39
    %756 = vmatprep.subr.mxu0 %v38
    %757 = vmatpush1.msra.mxu0 %v37
    %758 = vmatprep.subr.mxu0 %v36
    %759 = vmatpush1.msra.mxu0 %v35
    %760 = vmatprep.subr.mxu0 %v34
    %761 = vmatpush1.msra.mxu0 %v33
    %762 = vmatprep.subr.mxu0 %v32
    %763 = vmatpush1.msra.mxu0 %v31
    %764 = vmatprep.subr.mxu0 %v30
    %765 = vmatpush1.msra.mxu0 %v29
    %766 = vmatprep.subr.mxu0 0.0
    %767 = vmatpush2.msra.mxu0 0.0
    %768 = vmatprep.subr.mxu0 0.0
    %769 = vmatpush2.msra.mxu0 0.0
    %770 = vmatprep.subr.mxu0 0.0
    %771 = vmatpush2.msra.mxu0 0.0
    %772 = vmatprep.subr.mxu0 0.0
    %773 = vmatpush2.msra.mxu0 0.0
    %774 = vmatprep.subr.mxu0 0.0
    %775 = vmatpush2.msra.mxu0 0.0
    %776 = vmatprep.subr.mxu0 0.0
    %777 = vmatpush2.msra.mxu0 0.0
    %778 = vmatprep.subr.mxu0 0.0
    %779 = vmatpush2.msra.mxu0 0.0
    %780 = vmatprep.subr.mxu0 0.0
    %781 = vmatpush2.msra.mxu0 0.0
    %782 = vmatprep.subr.mxu0 0.0
    %783 = vmatpush2.msra.mxu0 0.0
    %784 = vmatprep.subr.mxu0 0.0
    %785 = vmatpush2.msra.mxu0 0.0
    %786 = vmatprep.subr.mxu0 0.0
    %787 = vmatpush2.msra.mxu0 0.0
    %788 = vmatprep.subr.mxu0 0.0
    %789 = vmatpush2.msra.mxu0 0.0
    %790 = vmatprep.subr.mxu0 0.0
    %791 = vmatpush2.msra.mxu0 0.0
    %792 = vmatprep.subr.mxu0 0.0
    %793 = vmatpush2.msra.mxu0 0.0
    %794 = vmatprep.subr.mxu0 0.0
    %795 = vmatpush2.msra.mxu0 0.0
    %796 = vmatprep.subr.mxu0 0.0
    %797 = vmatpush2.msra.mxu0 0.0
    %798 = vmatprep.mubr.f32.mxu0 0.0
    %799 = vmatmul.mubr.f32.gmra.mxu0 %v732
    %v800 = vpop.f32.mrf.mxu0
    %v801 = vadd.f32 0.0, %v800
    %v802 = vpop.f32.mrf.mxu0
    %v803 = vadd.f32 0.0, %v802
    %804 = vdwg.mxu0
    %v805 = vadd.f32 %v201, %v801
    %v806 = vadd.f32 %v203, %v803
    %v807 = vtanh.pop %v805
    %v808 = vtanh.pop %v806
    %v809 = vmul.f32 %v807, 0.5
    %v810 = vmul.f32 %v808, 0.5
    %v811 = vadd.f32 %v809, 0.5
    %v812 = vadd.f32 %v810, 0.5
    %v813 = vmul.f32 %v811, %v724
    %815 = vrot.lane.b32.xlu0 %v808, 64
    %v816 = vpop.permute.xlu0 %815
    %v818 = vmul.f32 %v811, %v816
    %820 = vrot.lane.b32.xlu0 %v818, 64
    %v821 = vpop.permute.xlu0 %820
    %v823 = vadd.f32 %v813, %v821
    %v824 = vtanh.pop %v823
    %826 = vrot.lane.b32.xlu0 %v824, 64
    %v827 = vpop.permute.xlu0 %826
    %v829 = vmul.f32 %v812, %v827
    %v831 = vsel %vm231, %v829, 0
    %833 = vmatprep.subr.mxu0 0.0
    %834 = vmatpush1.msra.mxu0 0.0
    %835 = vmatprep.subr.mxu0 0.0
    %836 = vmatpush1.msra.mxu0 0.0
    %837 = vmatprep.subr.mxu0 0.0
    %838 = vmatpush1.msra.mxu0 0.0
    %839 = vmatprep.subr.mxu0 0.0
    %840 = vmatpush1.msra.mxu0 0.0
    %841 = vmatprep.subr.mxu0 0.0
    %842 = vmatpush1.msra.mxu0 0.0
    %843 = vmatprep.subr.mxu0 0.0
    %844 = vmatpush1.msra.mxu0 0.0
    %845 = vmatprep.subr.mxu0 0.0
    %846 = vmatpush1.msra.mxu0 0.0
    %847 = vmatprep.subr.mxu0 0.0
    %848 = vmatpush1.msra.mxu0 0.0
    %849 = vmatprep.subr.mxu0 %v44
    %850 = vmatpush1.msra.mxu0 %v43
    %851 = vmatprep.subr.mxu0 %v42
    %852 = vmatpush1.msra.mxu0 %v41
    %853 = vmatprep.subr.mxu0 %v40
    %854 = vmatpush1.msra.mxu0 %v39
    %855 = vmatprep.subr.mxu0 %v38
    %856 = vmatpush1.msra.mxu0 %v37
    %857 = vmatprep.subr.mxu0 %v36
    %858 = vmatpush1.msra.mxu0 %v35
    %859 = vmatprep.subr.mxu0 %v34
    %860 = vmatpush1.msra.mxu0 %v33
    %861 = vmatprep.subr.mxu0 %v32
    %862 = vmatpush1.msra.mxu0 %v31
    %863 = vmatprep.subr.mxu0 %v30
    %864 = vmatpush1.msra.mxu0 %v29
    %865 = vmatprep.subr.mxu0 0.0
    %866 = vmatpush2.msra.mxu0 0.0
    %867 = vmatprep.subr.mxu0 0.0
    %868 = vmatpush2.msra.mxu0 0.0
    %869 = vmatprep.subr.mxu0 0.0
    %870 = vmatpush2.msra.mxu0 0.0
    %871 = vmatprep.subr.mxu0 0.0
    %872 = vmatpush2.msra.mxu0 0.0
    %873 = vmatprep.subr.mxu0 0.0
    %874 = vmatpush2.msra.mxu0 0.0
    %875 = vmatprep.subr.mxu0 0.0
    %876 = vmatpush2.msra.mxu0 0.0
    %877 = vmatprep.subr.mxu0 0.0
    %878 = vmatpush2.msra.mxu0 0.0
    %879 = vmatprep.subr.mxu0 0.0
    %880 = vmatpush2.msra.mxu0 0.0
    %881 = vmatprep.subr.mxu0 0.0
    %882 = vmatpush2.msra.mxu0 0.0
    %883 = vmatprep.subr.mxu0 0.0
    %884 = vmatpush2.msra.mxu0 0.0
    %885 = vmatprep.subr.mxu0 0.0
    %886 = vmatpush2.msra.mxu0 0.0
    %887 = vmatprep.subr.mxu0 0.0
    %888 = vmatpush2.msra.mxu0 0.0
    %889 = vmatprep.subr.mxu0 0.0
    %890 = vmatpush2.msra.mxu0 0.0
    %891 = vmatprep.subr.mxu0 0.0
    %892 = vmatpush2.msra.mxu0 0.0
    %893 = vmatprep.subr.mxu0 0.0
    %894 = vmatpush2.msra.mxu0 0.0
    %895 = vmatprep.subr.mxu0 0.0
    %896 = vmatpush2.msra.mxu0 0.0
    %897 = vmatprep.mubr.f32.mxu0 0.0
    %898 = vmatmul.mubr.f32.gmra.mxu0 %v831
    %v899 = vpop.f32.mrf.mxu0
    %v900 = vadd.f32 0.0, %v899
    %v901 = vpop.f32.mrf.mxu0
    %v902 = vadd.f32 0.0, %v901
    %903 = vdwg.mxu0
    %v904 = vadd.f32 %v207, %v900
    %v905 = vadd.f32 %v209, %v902
    %v906 = vtanh.pop %v904
    %v907 = vtanh.pop %v905
    %v908 = vmul.f32 %v906, 0.5
    %v909 = vmul.f32 %v907, 0.5
    %v910 = vadd.f32 %v908, 0.5
    %v911 = vadd.f32 %v909, 0.5
    %v912 = vmul.f32 %v910, %v823
    %914 = vrot.lane.b32.xlu0 %v907, 64
    %v915 = vpop.permute.xlu0 %914
    %v917 = vmul.f32 %v910, %v915
    %919 = vrot.lane.b32.xlu0 %v917, 64
    %v920 = vpop.permute.xlu0 %919
    %v922 = vadd.f32 %v912, %v920
    %v923 = vtanh.pop %v922
    %925 = vrot.lane.b32.xlu0 %v923, 64
    %v926 = vpop.permute.xlu0 %925
    %v928 = vmul.f32 %v911, %v926
    %v930 = vsel %vm231, %v928, 0
    %932 = vmatprep.subr.mxu0 0.0
    %933 = vmatpush1.msra.mxu0 0.0
    %934 = vmatprep.subr.mxu0 0.0
    %935 = vmatpush1.msra.mxu0 0.0
    %936 = vmatprep.subr.mxu0 0.0
    %937 = vmatpush1.msra.mxu0 0.0
    %938 = vmatprep.subr.mxu0 0.0
    %939 = vmatpush1.msra.mxu0 0.0
    %940 = vmatprep.subr.mxu0 0.0
    %941 = vmatpush1.msra.mxu0 0.0
    %942 = vmatprep.subr.mxu0 0.0
    %943 = vmatpush1.msra.mxu0 0.0
    %944 = vmatprep.subr.mxu0 0.0
    %945 = vmatpush1.msra.mxu0 0.0
    %946 = vmatprep.subr.mxu0 0.0
    %947 = vmatpush1.msra.mxu0 0.0
    %948 = vmatprep.subr.mxu0 %v44
    %949 = vmatpush1.msra.mxu0 %v43
    %950 = vmatprep.subr.mxu0 %v42
    %951 = vmatpush1.msra.mxu0 %v41
    %952 = vmatprep.subr.mxu0 %v40
    %953 = vmatpush1.msra.mxu0 %v39
    %954 = vmatprep.subr.mxu0 %v38
    %955 = vmatpush1.msra.mxu0 %v37
    %956 = vmatprep.subr.mxu0 %v36
    %957 = vmatpush1.msra.mxu0 %v35
    %958 = vmatprep.subr.mxu0 %v34
    %959 = vmatpush1.msra.mxu0 %v33
    %960 = vmatprep.subr.mxu0 %v32
    %961 = vmatpush1.msra.mxu0 %v31
    %962 = vmatprep.subr.mxu0 %v30
    %963 = vmatpush1.msra.mxu0 %v29
    %964 = vmatprep.subr.mxu0 0.0
    %965 = vmatpush2.msra.mxu0 0.0
    %966 = vmatprep.subr.mxu0 0.0
    %967 = vmatpush2.msra.mxu0 0.0
    %968 = vmatprep.subr.mxu0 0.0
    %969 = vmatpush2.msra.mxu0 0.0
    %970 = vmatprep.subr.mxu0 0.0
    %971 = vmatpush2.msra.mxu0 0.0
    %972 = vmatprep.subr.mxu0 0.0
    %973 = vmatpush2.msra.mxu0 0.0
    %974 = vmatprep.subr.mxu0 0.0
    %975 = vmatpush2.msra.mxu0 0.0
    %976 = vmatprep.subr.mxu0 0.0
    %977 = vmatpush2.msra.mxu0 0.0
    %978 = vmatprep.subr.mxu0 0.0
    %979 = vmatpush2.msra.mxu0 0.0
    %980 = vmatprep.subr.mxu0 0.0
    %981 = vmatpush2.msra.mxu0 0.0
    %982 = vmatprep.subr.mxu0 0.0
    %983 = vmatpush2.msra.mxu0 0.0
    %984 = vmatprep.subr.mxu0 0.0
    %985 = vmatpush2.msra.mxu0 0.0
    %986 = vmatprep.subr.mxu0 0.0
    %987 = vmatpush2.msra.mxu0 0.0
    %988 = vmatprep.subr.mxu0 0.0
    %989 = vmatpush2.msra.mxu0 0.0
    %990 = vmatprep.subr.mxu0 0.0
    %991 = vmatpush2.msra.mxu0 0.0
    %992 = vmatprep.subr.mxu0 0.0
    %993 = vmatpush2.msra.mxu0 0.0
    %994 = vmatprep.subr.mxu0 0.0
    %995 = vmatpush2.msra.mxu0 0.0
    %996 = vmatprep.mubr.f32.mxu0 0.0
    %997 = vmatmul.mubr.f32.gmra.mxu0 %v930
    %v998 = vpop.f32.mrf.mxu0
    %v999 = vadd.f32 0.0, %v998
    %v1000 = vpop.f32.mrf.mxu0
    %v1001 = vadd.f32 0.0, %v1000
    %1002 = vdwg.mxu0
    %v1003 = vadd.f32 %v51, %v999
    %v1004 = vadd.f32 %v55, %v1001
    %v1005 = vtanh.pop %v1003
    %v1006 = vtanh.pop %v1004
    %v1007 = vmul.f32 %v1005, 0.5
    %v1008 = vmul.f32 %v1006, 0.5
    %v1009 = vadd.f32 %v1007, 0.5
    %v1010 = vadd.f32 %v1008, 0.5
    %v1011 = vmul.f32 %v1009, %v922
    %1013 = vrot.lane.b32.xlu0 %v1006, 64
    %v1014 = vpop.permute.xlu0 %1013
    %v1016 = vmul.f32 %v1009, %v1014
    %1018 = vrot.lane.b32.xlu0 %v1016, 64
    %v1019 = vpop.permute.xlu0 %1018
    %v1021 = vadd.f32 %v1011, %v1019
    %v1022 = vtanh.pop %v1021
    %1024 = vrot.lane.b32.xlu0 %v1022, 64
    %v1025 = vpop.permute.xlu0 %1024
    %v1027 = vmul.f32 %v1010, %v1025
    %v1028 = vlaneseq
    %v1029 = vshrl.u32 %v1028, 7
    %v1030 = vsub.s32 0, %v1029
    %v1031 = vrot.slane %v46, %v1030
    %1033 = vrot.lane.b32.xlu0 %v1031, 32
    %v1034 = vpop.permute.xlu0 %1033
    %v1036 = vmul.f32 %v1027, %v1034
    %1038 = vrot.lane.b32.xlu0 %v1036, 96
    %v1039 = vpop.permute.xlu0 %1038
    %v1041 = vsel %vm211, %v1039, 0.0
    %1042 = vadd.xlane.f32.xlu0 %v1041
    %v1043 = vpop.xlane.xlu0 %1042
    %v1044 = vadd.f32 %v1043, %v1031
    %1046 = vrot.lane.b32.xlu0 %v1044, 96
    %v1047 = vpop.permute.xlu0 %1046
    %v1049 = vsub.f32 %v65, %v1047
    %v1050 = vmul.f32 %v1049, %v1049
    %1052 = vrot.lane.b32.xlu0 %v45, 120
    %v1053 = vpop.permute.xlu0 %1052
    %vm1055 = vcmask 64512
    %v1056 = vsel %vm1055, %v45, 0
    %1058 = vmatprep.subr.mxu0 0.0
    %1059 = vmatpush1.msra.mxu0 0.0
    %1060 = vmatprep.subr.mxu0 0.0
    %1061 = vmatpush1.msra.mxu0 0.0
    %1062 = vmatprep.subr.mxu0 0.0
    %1063 = vmatpush1.msra.mxu0 0.0
    %1064 = vmatprep.subr.mxu0 0.0
    %1065 = vmatpush1.msra.mxu0 0.0
    %1066 = vmatprep.subr.mxu0 0.0
    %1067 = vmatpush1.msra.mxu0 0.0
    %1068 = vmatprep.subr.mxu0 0.0
    %1069 = vmatpush1.msra.mxu0 0.0
    %1070 = vmatprep.subr.mxu0 0.0
    %1071 = vmatpush1.msra.mxu0 0.0
    %1072 = vmatprep.subr.mxu0 0.0
    %1073 = vmatpush1.msra.mxu0 0.0
    %1074 = vmatprep.subr.mxu0 0.0
    %1075 = vmatpush1.msra.mxu0 0.0
    %1076 = vmatprep.subr.mxu0 0.0
    %1077 = vmatpush1.msra.mxu0 0.0
    %1078 = vmatprep.subr.mxu0 0.0
    %1079 = vmatpush1.msra.mxu0 0.0
    %1080 = vmatprep.subr.mxu0 0.0
    %1081 = vmatpush1.msra.mxu0 0.0
    %1082 = vmatprep.subr.mxu0 0.0
    %1083 = vmatpush1.msra.mxu0 0.0
    %1084 = vmatprep.subr.mxu0 0.0
    %1085 = vmatpush1.msra.mxu0 0.0
    %1086 = vmatprep.subr.mxu0 0.0
    %1087 = vmatpush1.msra.mxu0 0.0
    %1088 = vmatprep.subr.mxu0 0.0
    %1089 = vmatpush1.msra.mxu0 %v1050
    %1090 = vmatprep.subr.mxu0 0.0
    %1091 = vmatpush2.msra.mxu0 0.0
    %1092 = vmatprep.subr.mxu0 0.0
    %1093 = vmatpush2.msra.mxu0 0.0
    %1094 = vmatprep.subr.mxu0 0.0
    %1095 = vmatpush2.msra.mxu0 0.0
    %1096 = vmatprep.subr.mxu0 0.0
    %1097 = vmatpush2.msra.mxu0 0.0
    %1098 = vmatprep.subr.mxu0 0.0
    %1099 = vmatpush2.msra.mxu0 0.0
    %1100 = vmatprep.subr.mxu0 0.0
    %1101 = vmatpush2.msra.mxu0 0.0
    %1102 = vmatprep.subr.mxu0 0.0
    %1103 = vmatpush2.msra.mxu0 0.0
    %1104 = vmatprep.subr.mxu0 0.0
    %1105 = vmatpush2.msra.mxu0 0.0
    %1106 = vmatprep.subr.mxu0 0.0
    %1107 = vmatpush2.msra.mxu0 0.0
    %1108 = vmatprep.subr.mxu0 0.0
    %1109 = vmatpush2.msra.mxu0 0.0
    %1110 = vmatprep.subr.mxu0 0.0
    %1111 = vmatpush2.msra.mxu0 0.0
    %1112 = vmatprep.subr.mxu0 0.0
    %1113 = vmatpush2.msra.mxu0 0.0
    %1114 = vmatprep.subr.mxu0 0.0
    %1115 = vmatpush2.msra.mxu0 0.0
    %1116 = vmatprep.subr.mxu0 0.0
    %1117 = vmatpush2.msra.mxu0 0.0
    %1118 = vmatprep.subr.mxu0 0.0
    %1119 = vmatpush2.msra.mxu0 0.0
    %1120 = vmatprep.subr.mxu0 0.0
    %1121 = vmatpush2.msra.mxu0 0.0
    %1122 = vmatprep.mubr.f32.mxu0 0.0
    %1123 = vmatmul.mubr.f32.gmra.mxu0 %v1056
    %v1124 = vpop.f32.mrf.mxu0
    %v1125 = vadd.f32 %v1053, %v1124
    %v1126 = vpop.f32.mrf.mxu0
    %1127 = vdwg.mxu0
    %1129 = vrot.lane.b32.xlu0 %v1125, 1
    %v1130 = vpop.permute.xlu0 %1129
    %vm1132 = vcmask 7168
    %v1133 = vsel %vm1132, %v1047, %v1130
    %vm1134 = vcmask 15360
    %1135 = vst.msk [vmem:[%s2] sm:$0xff] %vm1134, %v1133
    // Predicated region
    $region14: #{lstm_garch_forward.1} parent=1 // pred_check
      _
    $region15: #{lstm_garch_forward.1} parent=1 // pred_check_branch
      %1137 = sbr.rel (0) target = $region17
    $region16: #{lstm_garch_forward.1} parent=1 // pred_region
      _
    $region17: #{lstm_garch_forward.1} parent=1 // pred_fallthru
      _
    // Predicated region
    $region18: #{lstm_garch_forward.1} parent=1 // pred_check
      _
    $region19: #{lstm_garch_forward.1} parent=1 // pred_check_branch
      %1139 = sbr.rel (0) target = $region21
    $region20: #{lstm_garch_forward.1} parent=1 // pred_region
      _
    $region21: #{lstm_garch_forward.1} parent=1 // pred_fallthru
      _
    %1140 = vsyncpa [#allocation3], 1

</llo_original>
